<compile_context>
chip_gen: v7x
topology: tpu7x:2x2x1
jax: 0.10.0
libtpu: 0.0.40
codegen_flags: <defaults>
</compile_context>

<pallas_src>
import functools

import jax
import jax.numpy as jnp
from jax.experimental import pallas as pl
from jax.experimental.pallas import tpu as pltpu


def _cdiv(a, b):
    return -(-a // b)


def _min_value(dtype):
    dtype = jnp.dtype(dtype)
    if jnp.issubdtype(dtype, jnp.floating):
        return jnp.array(-jnp.inf, dtype)
    return jnp.array(jnp.iinfo(dtype).min, dtype)


def _avg_max_pool_kernel(x_ref, o_ref, sum_acc, max_acc, *, hw, hw_tile, fold,
                         mask_last):
    # x_ref:   (NB, CT, HT) input chunk for this (n, c, k) grid point.
    # o_ref:   (NB, CT, 1)  output block (resident across the k axis).
    # sum_acc: (NB, CT, HA) f32 running sum   (HA = HT//2 if fold else HT)
    # max_acc: (NB, CT, HA) running max in the input dtype (exact).
    k = pl.program_id(2)
    num_k = pl.num_programs(2)

    @pl.when(k == 0)
    def _init():
        sum_acc[...] = jnp.zeros_like(sum_acc)
        max_acc[...] = jnp.full(max_acc.shape, _min_value(max_acc.dtype),
                                max_acc.dtype)

    def _accumulate(masked):
        x = x_ref[...]
        if masked:
            # (1, 1, HT) iota, broadcast by jnp.where -- no full-block iota.
            lane = jax.lax.broadcasted_iota(jnp.int32, (1, 1, hw_tile), 2)
            valid = (k * hw_tile + lane) < hw
            x_s = jnp.where(valid, x, jnp.zeros((), x.dtype))
            x_m = jnp.where(valid, x, _min_value(x.dtype))
        else:
            x_s = x
            x_m = x
        if fold:
            # Fold the chunk once before touching the accumulators: halves
            # accumulator load/store traffic and VMEM.  Slices are 128-aligned.
            h2 = hw_tile // 2
            s = x_s[..., :h2].astype(jnp.float32) + x_s[..., h2:].astype(jnp.float32)
            m = jnp.maximum(x_m[..., :h2], x_m[..., h2:])
        else:
            s = x_s.astype(jnp.float32)
            m = x_m
        sum_acc[...] = sum_acc[...] + s
        max_acc[...] = jnp.maximum(max_acc[...], m.astype(max_acc.dtype))

    if mask_last:
        # Only the last chunk can be partial: keep the hot path select-free.
        @pl.when(k < num_k - 1)
        def _hot():
            _accumulate(masked=False)

        @pl.when(k == num_k - 1)
        def _tail():
            _accumulate(masked=True)
    else:
        _accumulate(masked=False)

    @pl.when(k == num_k - 1)
    def _finalize():
        s = jnp.sum(sum_acc[...], axis=-1, keepdims=True)            # (NB,CT,1)
        m = jnp.max(max_acc[...].astype(jnp.float32), axis=-1,
                    keepdims=True)                                    # (NB,CT,1)
        # (max + mean) / 2, constants folded.
        o_ref[...] = (m * 0.5 + s * (0.5 / hw)).astype(o_ref.dtype)


def adaptive_avg_max_pool2d(x, *, target_block_bytes=2 << 20, hw_tile_max=4096):
    """x: (N, C, H, W) -> (N, C, 1, 1); matches AdaptiveAvgMaxPool2d(output_size=1)."""
    N, C, H, W = x.shape
    HW = H * W
    x_flat = x.reshape(N, C, HW)
    itemsize = jnp.dtype(x.dtype).itemsize
    sub = 8 * max(1, 4 // max(itemsize, 1))   # sublane multiple: 8 f32 / 16 bf16 / 32 int8

    # ---- lane (reduction) tile: full extent, or a multiple of 256 so the
    # in-kernel fold keeps 128-aligned lane slices.
    hw_tile_max = max(256, (hw_tile_max // 256) * 256)
    HT = HW if HW <= hw_tile_max else hw_tile_max
    num_k = _cdiv(HW, HT)
    mask_last = (HW % HT) != 0
    fold = (HT % 256) == 0
    acc_lane = HT // 2 if fold else HT

    # ---- channel tile: full C, or a sublane-multiple tile sized so the input
    # block approaches the target; partial last channel tile is allowed
    # (padded rows land out of range and are dropped by the masked store).
    row_bytes = HT * itemsize
    if C <= sub or C * row_bytes <= target_block_bytes:
        CT = C
    else:
        CT = max(sub, (target_block_bytes // row_bytes) // sub * sub)
        CT = min(CT, C)
    num_c = _cdiv(C, CT)

    # ---- batch folding: grow the per-step HBM block toward the target so the
    # ~0.35 us/step pipeline overhead is amortized (tiny-image CNN shapes).
    block_bytes = CT * HT * itemsize
    NB = int(max(1, min(N, target_block_bytes // block_bytes)))
    num_n = _cdiv(N, NB)

    # ---- keep >= 2 steps on the parallel axes when there is enough work:
    # v7x shards "parallel" grid axes across its 2 TensorCores.
    total_bytes = N * C * HW * itemsize
    if num_n * num_c == 1 and total_bytes >= (4 << 20):
        if N >= 2:
            NB = (N + 1) // 2
            num_n = _cdiv(N, NB)
        elif C > sub:
            CT = max(sub, _cdiv((C + 1) // 2, sub) * sub)
            num_c = _cdiv(C, CT)
        # else: N == 1 and C <= sub -- nothing sensible to split.
    block_bytes = NB * CT * HT * itemsize

    # Max is exact in any dtype: keep the max accumulator in the input dtype
    # (halves its VMEM and store traffic for bf16/f16); sum stays f32.
    if jnp.issubdtype(x.dtype, jnp.floating) and itemsize <= 4:
        max_dtype = x.dtype
    else:
        max_dtype = jnp.float32

    # VMEM budget: double-buffered input + both accumulators + output block.
    vmem_need = (2 * block_bytes
                 + NB * CT * acc_lane * (4 + jnp.dtype(max_dtype).itemsize)
                 + 2 * NB * CT * itemsize)
    cp_kwargs = dict(dimension_semantics=("parallel", "parallel", "arbitrary"))
    if vmem_need > (12 << 20):
        # Only needed if a user-supplied target exceeds the smallest (v5e)
        # scoped-VMEM default; stays well under v7x's 64 MiB physical VMEM.
        cp_kwargs["vmem_limit_bytes"] = int(min(vmem_need + (4 << 20), 48 << 20))

    kernel = functools.partial(
        _avg_max_pool_kernel, hw=HW, hw_tile=HT, fold=fold, mask_last=mask_last)

    out = pl.pallas_call(
        kernel,
        out_shape=jax.ShapeDtypeStruct((N, C, 1), x.dtype),
        grid=(num_n, num_c, num_k),
        in_specs=[pl.BlockSpec((NB, CT, HT), lambda n, c, k: (n, c, k))],
        out_specs=pl.BlockSpec((NB, CT, 1), lambda n, c, k: (n, c, 0)),
        scratch_shapes=[
            pltpu.VMEM((NB, CT, acc_lane), jnp.float32),  # running sum
            pltpu.VMEM((NB, CT, acc_lane), max_dtype),    # running max
        ],
        compiler_params=pltpu.CompilerParams(**cp_kwargs),
        cost_estimate=pl.CostEstimate(
            flops=2 * N * C * HW,
            transcendentals=0,
            bytes_accessed=N * C * HW * itemsize + N * C * itemsize),
    )(x_flat)

    return out.reshape(N, C, 1, 1)


def _reference(x):
    xf = x.astype(jnp.float32)
    avg = jnp.mean(xf, axis=(2, 3), keepdims=True)
    mx = jnp.max(xf, axis=(2, 3), keepdims=True)
    return ((mx + avg) / 2.0).astype(x.dtype)


if __name__ == "__main__":
    key = jax.random.PRNGKey(0)
    k1, k2, k3, k4 = jax.random.split(key, 4)

    # 1) Small shape consistent with the module (single-step, full-extent tiles).
    x1 = jax.random.normal(k1, (2, 4, 16, 16), dtype=jnp.float32)
    out1 = jax.block_until_ready(adaptive_avg_max_pool2d(x1))
    assert out1.shape == (2, 4, 1, 1), out1.shape
    assert jnp.allclose(out1, _reference(x1), atol=2e-5, rtol=1e-5), "mismatch (small)"

    # 2) HW = 1600: full-extent lane tile that is not a multiple of 256 (no fold).
    x2 = jax.random.normal(k2, (2, 16, 40, 40), dtype=jnp.float32)
    out2 = jax.block_until_ready(adaptive_avg_max_pool2d(x2))
    assert jnp.allclose(out2, _reference(x2), atol=2e-5, rtol=1e-5), "mismatch (1600)"

    # 3) HW = 6400 > 4096: tiled k axis with masked partial last chunk + fold.
    x3 = jax.random.normal(k3, (1, 12, 80, 80), dtype=jnp.float32)
    out3 = jax.block_until_ready(adaptive_avg_max_pool2d(x3))
    assert jnp.allclose(out3, _reference(x3), atol=2e-5, rtol=1e-5), "mismatch (tiled k)"

    # 4) bf16 input + partial channel tile (CT=16 over C=20) + bf16 max accumulator.
    x4 = jax.random.normal(k4, (2, 20, 32, 32), dtype=jnp.bfloat16)
    out4 = jax.block_until_ready(
        adaptive_avg_max_pool2d(x4, target_block_bytes=32 << 10))
    assert out4.shape == (2, 20, 1, 1), out4.shape
    assert jnp.allclose(out4.astype(jnp.float32), _reference(x4).astype(jnp.float32),
                        atol=2e-2, rtol=2e-2), "mismatch (bf16 / partial CT)"

    print("KERNEL_OK")
</pallas_src>

<mosaic_0001>
module attributes {stable_mosaic.version = 11 : i64} {
  func.func @_avg_max_pool_kernel(%arg0: i32, %arg1: i32, %arg2: i32, %arg3: memref<2x4x256xf32, #tpu.memory_space<vmem>>, %arg4: memref<2x4x1xf32, #tpu.memory_space<vmem>>, %arg5: memref<2x4x128xf32, #tpu.memory_space<vmem>>, %arg6: memref<2x4x128xf32, #tpu.memory_space<vmem>>) attributes {dimension_semantics = [#tpu.dimension_semantics<parallel>, #tpu.dimension_semantics<parallel>, #tpu.dimension_semantics<arbitrary>], iteration_bounds = array<i64: 1, 1, 1>, scalar_prefetch = 0 : i64, scratch_operands = 2 : i64, tpu.core_type = #tpu.core_type<tc>, window_params = [{transform_indices = @transform_0, window_bounds = array<i64: 2, 4, 256>}, {transform_indices = @transform_1, window_bounds = array<i64: 2, 4, 1>}]} {
    %c0_i32 = arith.constant 0 : i32
    %0 = arith.cmpi eq, %arg2, %c0_i32 : i32
    %1 = arith.extui %0 : i1 to i32
    %c0_i32_0 = arith.constant 0 : i32
    %2 = arith.cmpi ne, %1, %c0_i32_0 : i32
    scf.if %2 {
      %cst = arith.constant 0.000000e+00 : f32
      %19 = vector.broadcast %cst : f32 to vector<2x4x128xf32>
      %c0_17 = arith.constant 0 : index
      %c0_18 = arith.constant 0 : index
      %c0_19 = arith.constant 0 : index
      %20 = vector.load %arg5[%c0_17, %c0_18, %c0_19] : memref<2x4x128xf32, #tpu.memory_space<vmem>>, vector<2x4x128xf32>
      tpu.vector_store %arg5[%c0_17, %c0_18, %c0_19], %19 {strides = array<i32>} : memref<2x4x128xf32, #tpu.memory_space<vmem>>, vector<2x4x128xf32>,
      %cst_20 = arith.constant 0xFF800000 : f32
      %21 = vector.broadcast %cst_20 : f32 to vector<2x4x128xf32>
      %c0_21 = arith.constant 0 : index
      %c0_22 = arith.constant 0 : index
      %c0_23 = arith.constant 0 : index
      %22 = vector.load %arg6[%c0_21, %c0_22, %c0_23] : memref<2x4x128xf32, #tpu.memory_space<vmem>>, vector<2x4x128xf32>
      tpu.vector_store %arg6[%c0_21, %c0_22, %c0_23], %21 {strides = array<i32>} : memref<2x4x128xf32, #tpu.memory_space<vmem>>, vector<2x4x128xf32>,
    } else {
    }
    %c0 = arith.constant 0 : index
    %c0_1 = arith.constant 0 : index
    %c0_2 = arith.constant 0 : index
    %3 = vector.load %arg3[%c0, %c0_1, %c0_2] : memref<2x4x256xf32, #tpu.memory_space<vmem>>, vector<2x4x256xf32>
    %4 = vector.extract_strided_slice %3 {offsets = [0, 0, 0], sizes = [2, 4, 128], strides = [1, 1, 1]} : vector<2x4x256xf32> to vector<2x4x128xf32>
    %5 = vector.extract_strided_slice %3 {offsets = [0, 0, 128], sizes = [2, 4, 128], strides = [1, 1, 1]} : vector<2x4x256xf32> to vector<2x4x128xf32>
    %6 = arith.addf %4, %5 : vector<2x4x128xf32>
    %7 = vector.extract_strided_slice %3 {offsets = [0, 0, 0], sizes = [2, 4, 128], strides = [1, 1, 1]} : vector<2x4x256xf32> to vector<2x4x128xf32>
    %8 = vector.extract_strided_slice %3 {offsets = [0, 0, 128], sizes = [2, 4, 128], strides = [1, 1, 1]} : vector<2x4x256xf32> to vector<2x4x128xf32>
    %9 = arith.maximumf %7, %8 : vector<2x4x128xf32>
    %c0_3 = arith.constant 0 : index
    %c0_4 = arith.constant 0 : index
    %c0_5 = arith.constant 0 : index
    %10 = vector.load %arg5[%c0_3, %c0_4, %c0_5] : memref<2x4x128xf32, #tpu.memory_space<vmem>>, vector<2x4x128xf32>
    %11 = arith.addf %10, %6 : vector<2x4x128xf32>
    %c0_6 = arith.constant 0 : index
    %c0_7 = arith.constant 0 : index
    %c0_8 = arith.constant 0 : index
    %12 = vector.load %arg5[%c0_6, %c0_7, %c0_8] : memref<2x4x128xf32, #tpu.memory_space<vmem>>, vector<2x4x128xf32>
    tpu.vector_store %arg5[%c0_6, %c0_7, %c0_8], %11 {strides = array<i32>} : memref<2x4x128xf32, #tpu.memory_space<vmem>>, vector<2x4x128xf32>,
    %c0_9 = arith.constant 0 : index
    %c0_10 = arith.constant 0 : index
    %c0_11 = arith.constant 0 : index
    %13 = vector.load %arg6[%c0_9, %c0_10, %c0_11] : memref<2x4x128xf32, #tpu.memory_space<vmem>>, vector<2x4x128xf32>
    %14 = arith.maximumf %13, %9 : vector<2x4x128xf32>
    %c0_12 = arith.constant 0 : index
    %c0_13 = arith.constant 0 : index
    %c0_14 = arith.constant 0 : index
    %15 = vector.load %arg6[%c0_12, %c0_13, %c0_14] : memref<2x4x128xf32, #tpu.memory_space<vmem>>, vector<2x4x128xf32>
    tpu.vector_store %arg6[%c0_12, %c0_13, %c0_14], %14 {strides = array<i32>} : memref<2x4x128xf32, #tpu.memory_space<vmem>>, vector<2x4x128xf32>,
    %c0_i32_15 = arith.constant 0 : i32
    %16 = arith.cmpi eq, %arg2, %c0_i32_15 : i32
    %17 = arith.extui %16 : i1 to i32
    %c0_i32_16 = arith.constant 0 : i32
    %18 = arith.cmpi ne, %17, %c0_i32_16 : i32
    scf.if %18 {
      %c0_17 = arith.constant 0 : index
      %c0_18 = arith.constant 0 : index
      %c0_19 = arith.constant 0 : index
      %19 = vector.load %arg5[%c0_17, %c0_18, %c0_19] : memref<2x4x128xf32, #tpu.memory_space<vmem>>, vector<2x4x128xf32>
      %cst = arith.constant dense<0.000000e+00> : vector<2x4xf32>
      %20 = vector.multi_reduction <add>, %19, %cst [2] : vector<2x4x128xf32> to vector<2x4xf32>
      %21 = vector.shape_cast %20 : vector<2x4xf32> to vector<2x4x1xf32>
      %c0_20 = arith.constant 0 : index
      %c0_21 = arith.constant 0 : index
      %c0_22 = arith.constant 0 : index
      %22 = vector.load %arg6[%c0_20, %c0_21, %c0_22] : memref<2x4x128xf32, #tpu.memory_space<vmem>>, vector<2x4x128xf32>
      %cst_23 = arith.constant dense<0xFF800000> : vector<2x4xf32>
      %23 = vector.multi_reduction <maximumf>, %22, %cst_23 [2] : vector<2x4x128xf32> to vector<2x4xf32>
      %24 = vector.shape_cast %23 : vector<2x4xf32> to vector<2x4x1xf32>
      %cst_24 = arith.constant 5.000000e-01 : f32
      %25 = vector.broadcast %cst_24 : f32 to vector<2x4x1xf32>
      %26 = arith.mulf %24, %25 : vector<2x4x1xf32>
      %cst_25 = arith.constant 0.001953125 : f32
      %27 = vector.broadcast %cst_25 : f32 to vector<2x4x1xf32>
      %28 = arith.mulf %21, %27 : vector<2x4x1xf32>
      %29 = arith.addf %26, %28 : vector<2x4x1xf32>
      %c0_26 = arith.constant 0 : index
      %c0_27 = arith.constant 0 : index
      %c0_28 = arith.constant 0 : index
      %30 = vector.load %arg4[%c0_26, %c0_27, %c0_28] : memref<2x4x1xf32, #tpu.memory_space<vmem>>, vector<2x4x1xf32>
      tpu.vector_store %arg4[%c0_26, %c0_27, %c0_28], %29 {strides = array<i32>} : memref<2x4x1xf32, #tpu.memory_space<vmem>>, vector<2x4x1xf32>,
    } else {
    }
    return
  }
  func.func @transform_0(%arg0: i32, %arg1: i32, %arg2: i32) -> (i32, i32, i32) {
    %c0_i32 = arith.constant 0 : i32
    return %arg0, %arg1, %arg2 : i32, i32, i32
  }
  func.func @transform_1(%arg0: i32, %arg1: i32, %arg2: i32) -> (i32, i32, i32) {
    %c0_i32 = arith.constant 0 : i32
    %c0_i32_0 = arith.constant 0 : i32
    return %arg0, %arg1, %c0_i32 : i32, i32, i32
  }
}

</mosaic_0001>

<llo_original>
// kernel: tpu_custom_call.1
$region0: #{tpu_custom_call.1}
  #allocation0 [shape = 'u32[]', space=smem, size = 0x4, offset = 0x4, fixed_abs, tag = 'smem constant byte address 0x4 - core index']
  #allocation1 [shape = 'u32[144,128]{1,0:T(1,128)}', space=vmem, size = 0x12000, scoped, tag = 'internal scratch']
  #allocation2 [shape = 'f32[2,4,128]{2,1,0:T(4,128)}', space=vmem, size = 0x1000, scoped, tag = 'scratch operand']
  #allocation3 [shape = 'f32[2,4,128]{2,1,0:T(4,128)}', space=vmem, size = 0x1000, scoped, tag = 'scratch operand']
  %s0 = inlined_call_operand.hbm [shape: f32[2,4,256], index: 0, kind: input, shape index: {}]
  %s1 = inlined_call_operand.vmem [shape: f32[2,4,1], index: 1, kind: output, shape index: {}]
  %s2 = sld [smem:[#allocation0]]
  $region26: #{tpu_custom_call.1} parent=0
    _
  %s4 = ssub.s32 1, %s2
  %s5 = scalar_select 0, %s4, %s2
  $region1: #{tpu_custom_call.1} parent=0
    #allocation4 [shape = 'u8[8192]{0}', space=vmem, size = 0x2000, scoped, tag = 'input window, operand 0, single buffered']
    #allocation5 [shape = 's32[1]{0}', space=sflag, size = 0x4, scoped, tag = 'scoped memory for tpu_custom_call.1']
    %6 = vsyncpa [#allocation5], 0
    // Predicated region
    $region2: #{tpu_custom_call.1} parent=1 // pred_check
      _
    $region3: #{tpu_custom_call.1} parent=1 // pred_check_branch
      %8 = sbr.rel (0) target = $region5
    $region4: #{tpu_custom_call.1} parent=1 // pred_region
      %s10 = ssub.s32 256, 256
      %11 = vsyncadd [#allocation5], %s10
      %s12 = sshll.u32 [#allocation4], 4
      %s13 = int_to_ptr.vmem [resolvable:$true] %s12
      %18 = dma.hbm_to_vmem [thread:$0]  %s0, 256, %s13, [#allocation5], 128, 128, 8
    $region5: #{tpu_custom_call.1} parent=1 // pred_fallthru
      _
    // Predicated region
    $region6: #{tpu_custom_call.1} parent=1 // pred_check
      _
    $region7: #{tpu_custom_call.1} parent=1 // pred_check_branch
      %20 = sbr.rel (0) target = $region9
    $region8: #{tpu_custom_call.1} parent=1 // pred_region
      %21 = dma.done [#allocation5], 256
    $region9: #{tpu_custom_call.1} parent=1 // pred_fallthru
      _
    %p22 = scmp.eq.s32.totalorder 0, 0
    // Predicated region
    $region10: #{tpu_custom_call.1} parent=1 // pred_check
      %p23 = pneg %p22
    $region11: #{tpu_custom_call.1} parent=1 // pred_check_branch
      %25 = sbr.rel (%p23) target = $region13
    $region12: #{tpu_custom_call.1} parent=1 // pred_region
      %26 = vst [vmem:[#allocation2] sm:$0xf] 0.0
      %27 = vst [vmem:[#allocation2 + $0x4] sm:$0xf] 0.0
      %28 = vst [vmem:[#allocation3] sm:$0xf] -inf
      %29 = vst [vmem:[#allocation3 + $0x4] sm:$0xf] -inf
    $region13: #{tpu_custom_call.1} parent=1 // pred_fallthru
      _
    %v30 = vld [vmem:[#allocation4] sm:$0xff]
    %v31 = vld [vmem:[#allocation4 + $0x8] sm:$0xff]
    %v34 = vrot.slane %v30, 4
    %v35 = vrot.slane %v31, 4
    %v38 = vadd.f32 %v30, %v34
    %v39 = vadd.f32 %v31, %v35
    %v40 = vmax.f32 %v30, %v34
    %v41 = vmax.f32 %v31, %v35
    %v42 = vld [vmem:[#allocation2] sm:$0xf]
    %v43 = vld [vmem:[#allocation2 + $0x4] sm:$0xf]
    %v44 = vadd.f32 %v42, %v38
    %v45 = vadd.f32 %v43, %v39
    %46 = vst [vmem:[#allocation2] sm:$0xf] %v44
    %47 = vst [vmem:[#allocation2 + $0x4] sm:$0xf] %v45
    %v48 = vld [vmem:[#allocation3] sm:$0xf]
    %v49 = vld [vmem:[#allocation3 + $0x4] sm:$0xf]
    %v50 = vmax.f32 %v48, %v40
    %v51 = vmax.f32 %v49, %v41
    %52 = vst [vmem:[#allocation3] sm:$0xf] %v50
    %53 = vst [vmem:[#allocation3 + $0x4] sm:$0xf] %v51
    // Predicated region
    $region14: #{tpu_custom_call.1} parent=1 // pred_check
      %p54 = pneg %p22
    $region15: #{tpu_custom_call.1} parent=1 // pred_check_branch
      %56 = sbr.rel (%p54) target = $region17
    $region16: #{tpu_custom_call.1} parent=1 // pred_region
      %v57 = vld [vmem:[#allocation2] sm:$0xf]
      %v58 = vld [vmem:[#allocation2 + $0x4] sm:$0xf]
      %vm59 = vcmask 1043456
      %v60 = vsel %vm59, %v57, 0.0
      %61 = vadd.xlane.f32.xlu0 %v60
      %v62 = vpop.xlane.xlu0 %61
      %v63 = vsel %vm59, %v58, 0.0
      %64 = vadd.xlane.f32.xlu0 %v63
      %v65 = vpop.xlane.xlu0 %64
      %v66 = vld [vmem:[#allocation3] sm:$0xf]
      %v67 = vld [vmem:[#allocation3 + $0x4] sm:$0xf]
      %v68 = vsel %vm59, %v66, -inf
      %69 = vmax.xlane.f32.xlu0 %v68
      %v70 = vpop.xlane.xlu0 %69
      %v71 = vsel %vm59, %v67, -inf
      %72 = vmax.xlane.f32.xlu0 %v71
      %v73 = vpop.xlane.xlu0 %72
      %v74 = vmul.f32 %v70, 0.5
      %v75 = vmul.f32 %v73, 0.5
      %v76 = vmul.f32 %v62, 0.001953125
      %v77 = vmul.f32 %v65, 0.001953125
      %v78 = vadd.f32 %v74, %v76
      %v79 = vadd.f32 %v75, %v77
      %vm80 = vcmask 3072
      %81 = vst.msk [vmem:[%s1] sm:$0xf] %vm80, %v78
      %82 = vst.msk [vmem:[%s1 + $0x4] sm:$0xf] %vm80, %v79
    $region17: #{tpu_custom_call.1} parent=1 // pred_fallthru
      _
    // Predicated region
    $region18: #{tpu_custom_call.1} parent=1 // pred_check
      _
    $region19: #{tpu_custom_call.1} parent=1 // pred_check_branch
      %84 = sbr.rel (0) target = $region21
    $region20: #{tpu_custom_call.1} parent=1 // pred_region
      _
    $region21: #{tpu_custom_call.1} parent=1 // pred_fallthru
      _
    // Predicated region
    $region22: #{tpu_custom_call.1} parent=1 // pred_check
      _
    $region23: #{tpu_custom_call.1} parent=1 // pred_check_branch
      %86 = sbr.rel (0) target = $region25
    $region24: #{tpu_custom_call.1} parent=1 // pred_region
      _
    $region25: #{tpu_custom_call.1} parent=1 // pred_fallthru
      _
    %87 = vsyncpa [#allocation5], 1

</llo_original>
